<compile_context>
chip_gen: v5e
topology: v5e:2x2
jax: 0.10.0
libtpu: 0.0.40
codegen_flags: <defaults>
</compile_context>

<pallas_src>
import functools

import jax
import jax.numpy as jnp
from jax import lax
from jax.experimental import pallas as pl
from jax.experimental.pallas import tpu as pltpu

_EPS = 1e-8  # torch.nn.CosineSimilarity default eps


def _round_up(x, m):
    return ((x + m - 1) // m) * m


def _instr_sim_kernel(instr_ref, state_ref, w_ref, b_ref, out_ref,
                      ssum_acc, ssq_acc, hsum_ref, hsq_ref,
                      *, n_state, n_instr, d_true, tn, mask_rows, mask_lanes):
    pid = pl.program_id(0)

    @pl.when(pid == 0)
    def _():
        ssum_acc[...] = jnp.zeros_like(ssum_acc)
        ssq_acc[...] = jnp.zeros_like(ssq_acc)
        # One-shot hidden(instruction) = instruction @ W^T + b.  W arrives
        # pre-transposed, so this is a plain contraction.  Doing it at step 0
        # lets the MXU work + W DMA overlap with the prefetch of the next
        # state blocks instead of serializing at the end of the grid.
        h = jnp.dot(instr_ref[...], w_ref[...],
                    preferred_element_type=jnp.float32) + b_ref[...]
        hsum_ref[...] = jnp.sum(h, axis=0, keepdims=True)        # (1, Dp)
        hsq_ref[...] = jnp.sum(h * h, axis=0, keepdims=True)     # (1, Dp)

    # --- streaming state reduction (the only O(Ls*D) HBM traffic) ---
    s = state_ref[...].astype(jnp.float32)                       # (TN, Dp)
    if mask_rows or mask_lanes:
        # Ragged last row block and/or lane-padded columns: the out-of-bounds
        # region of the VMEM block is unspecified, so zero it before use.
        ok = None
        if mask_rows:
            row = lax.broadcasted_iota(jnp.int32, s.shape, 0) + pid * tn
            ok = row < n_state
        if mask_lanes:
            lane_ok = lax.broadcasted_iota(jnp.int32, s.shape, 1) < d_true
            ok = lane_ok if ok is None else (ok & lane_ok)
        s = jnp.where(ok, s, jnp.float32(0.0))
    ssum_acc[...] += jnp.sum(s, axis=0, keepdims=True)            # (1, Dp)
    ssq_acc[...] += jnp.sum(s * s, axis=0, keepdims=True)         # (1, Dp)

    @pl.when(pid == pl.num_programs(0) - 1)
    def _():
        ls = jnp.float32(n_state)
        li = jnp.float32(n_instr)
        # Factorized per-column cosine of the expanded (Li*Ls, D) problem.
        num = hsum_ref[...] * ssum_acc[...]
        den2 = (ls * hsq_ref[...]) * (li * ssq_acc[...])
        # rsqrt (EUP) instead of sqrt+divide; num/max(sqrt(den2), eps) matches
        # the reference.  Padded columns are exact zeros (num = den2 = 0).
        cos = num * lax.rsqrt(jnp.maximum(den2, jnp.float32(_EPS * _EPS)))
        # Fused mean over the true D columns (padded columns contribute 0).
        out_ref[...] = (jnp.sum(cos, axis=1, keepdims=True)
                        * jnp.float32(1.0 / d_true))


def instruction_similarity_forward(state, instruction, w, b, *, block_rows=None):
    """state: (Ls, D), instruction: (Li, D), w: (D, D), b: (D,). Returns scalar."""
    Ls, D = state.shape
    Li, Di = instruction.shape
    H, Dw = w.shape
    assert D == Di and Dw == D and b.shape == (H,)
    # CosineSimilarity(dim=0)(hidden(r), s) only type-checks when H == D.
    assert H == D, "forward only defined for hidden_size == input_size"

    # Lane dimension padded to a multiple of 128 (zero columns are inert).
    Dp = pl.cdiv(D, 128) * 128

    # Row tiling of the state stream.  Default targets ~4 MiB per block
    # (8 MiB double-buffered) so the loop is bandwidth-, not overhead-bound.
    if block_rows is None:
        block_rows = max(1024, (4 << 20) // (Dp * 4))
    TN = _round_up(min(block_rows, _round_up(Ls, 8)), 8)
    grid = pl.cdiv(Ls, TN)

    f32 = jnp.float32
    # Only the small operands are padded/copied host-side; the dominant state
    # stream is consumed directly from HBM (ragged edges masked in-kernel).
    instr_p = jnp.pad(instruction.astype(f32), ((0, 0), (0, Dp - D)))
    wt_p = jnp.pad(w.astype(f32).T, ((0, Dp - D), (0, Dp - D)))  # pre-transposed
    b_p = jnp.pad(b.astype(f32).reshape(1, -1), ((0, 0), (0, Dp - D)))

    kernel = functools.partial(
        _instr_sim_kernel,
        n_state=Ls, n_instr=Li, d_true=D, tn=TN,
        mask_rows=(Ls % TN) != 0, mask_lanes=(Dp != D))

    # VMEM budget: double-buffered state blocks + resident instruction/W/b
    # + scratch, with 2x headroom, clamped to a range safe on v5e/v6e/v7x.
    est_vmem = 4 * (2 * TN * Dp + 2 * max(Li, 8) * Dp + 2 * Dp * Dp
                    + 2 * 8 * Dp + 4 * 8 * Dp + 2 * 8 * 128)
    vmem_limit = int(min(max(2 * est_vmem, 16 << 20), 64 << 20))

    out = pl.pallas_call(
        kernel,
        out_shape=jax.ShapeDtypeStruct((1, 1), jnp.float32),
        grid_spec=pltpu.PrefetchScalarGridSpec(
            num_scalar_prefetch=0,
            grid=(grid,),
            in_specs=[
                pl.BlockSpec((Li, Dp), lambda i: (0, 0)),   # instruction (resident)
                pl.BlockSpec((TN, Dp), lambda i: (i, 0)),   # state row blocks
                pl.BlockSpec((Dp, Dp), lambda i: (0, 0)),   # W^T (resident)
                pl.BlockSpec((1, Dp), lambda i: (0, 0)),    # bias (resident)
            ],
            out_specs=pl.BlockSpec((1, 1), lambda i: (0, 0)),
            scratch_shapes=[pltpu.VMEM((1, Dp), jnp.float32),   # sum_l state
                            pltpu.VMEM((1, Dp), jnp.float32),   # sum_l state^2
                            pltpu.VMEM((1, Dp), jnp.float32),   # sum_i h
                            pltpu.VMEM((1, Dp), jnp.float32)],  # sum_i h^2
        ),
        compiler_params=pltpu.CompilerParams(
            dimension_semantics=("arbitrary",),
            vmem_limit_bytes=vmem_limit),
    )(instr_p, state, wt_p, b_p)

    return out[0, 0]


def _reference(state, instruction, w, b):
    """Brute-force expanded reference (matches the PyTorch forward)."""
    Ls = state.shape[0]
    Li = instruction.shape[0]
    s = jnp.tile(state, (Li, 1))
    r = jnp.repeat(instruction, Ls, axis=0)
    h = r @ w.T + b
    num = jnp.sum(h * s, axis=0)
    denom = jnp.maximum(jnp.sqrt(jnp.sum(h * h, 0) * jnp.sum(s * s, 0)), _EPS)
    return jnp.mean(num / denom)


if __name__ == "__main__":
    # NOTE: the original forward only type-checks when hidden_size == input_size
    # (self.out is never used in forward), so we use the int hidden_size case.
    input_size = 32
    hidden_size = 32
    Ls, Li = 20, 5  # state rows, instruction rows (Ls deliberately not 8-aligned)

    key = jax.random.PRNGKey(0)
    k1, k2, k3, k4 = jax.random.split(key, 4)
    state = jax.random.normal(k1, (Ls, input_size), dtype=jnp.float32)
    instruction = jax.random.normal(k2, (Li, input_size), dtype=jnp.float32)

    # deterministic nn.Linear-style init: U(-1/sqrt(fan_in), 1/sqrt(fan_in))
    bound = 1.0 / (input_size ** 0.5)
    w = jax.random.uniform(k3, (hidden_size, input_size), jnp.float32, -bound, bound)
    b = jax.random.uniform(k4, (hidden_size,), jnp.float32, -bound, bound)

    ref = _reference(state, instruction, w, b)

    # Default tile: one resident block covering all state rows.
    out1 = jax.block_until_ready(
        instruction_similarity_forward(state, instruction, w, b))
    # Tiny tile: multi-step grid exercising the streaming accumulators, the
    # step-0 matmul stash and the ragged last-block row mask.
    out2 = jax.block_until_ready(
        instruction_similarity_forward(state, instruction, w, b, block_rows=8))

    assert jnp.allclose(out1, ref, atol=1e-5, rtol=1e-4), (float(out1), float(ref))
    assert jnp.allclose(out2, ref, atol=1e-5, rtol=1e-4), (float(out2), float(ref))
    print("KERNEL_OK")
</pallas_src>

<mosaic_0001>
module attributes {stable_mosaic.version = 11 : i64} {
  func.func @_instr_sim_kernel(%arg0: i32, %arg1: memref<5x128xf32, #tpu.memory_space<vmem>>, %arg2: memref<24x128xf32, #tpu.memory_space<vmem>>, %arg3: memref<128x128xf32, #tpu.memory_space<vmem>>, %arg4: memref<1x128xf32, #tpu.memory_space<vmem>>, %arg5: memref<1x1xf32, #tpu.memory_space<vmem>>, %arg6: memref<1x128xf32, #tpu.memory_space<vmem>>, %arg7: memref<1x128xf32, #tpu.memory_space<vmem>>, %arg8: memref<1x128xf32, #tpu.memory_space<vmem>>, %arg9: memref<1x128xf32, #tpu.memory_space<vmem>>) attributes {dimension_semantics = [#tpu.dimension_semantics<arbitrary>], iteration_bounds = array<i64: 1>, scalar_prefetch = 0 : i64, scratch_operands = 4 : i64, tpu.core_type = #tpu.core_type<tc>, window_params = [{pipeline_mode = #tpu.pipeline_mode<synchronous>, transform_indices = @transform_0, window_bounds = array<i64: 5, 128>}, {transform_indices = @transform_1, window_bounds = array<i64: 24, 128>}, {pipeline_mode = #tpu.pipeline_mode<synchronous>, transform_indices = @transform_2, window_bounds = array<i64: 128, 128>}, {pipeline_mode = #tpu.pipeline_mode<synchronous>, transform_indices = @transform_3, window_bounds = array<i64: 1, 128>}, {pipeline_mode = #tpu.pipeline_mode<synchronous>, transform_indices = @transform_4, window_bounds = array<i64: 1, 1>}]} {
    %c0_i32 = arith.constant 0 : i32
    %0 = arith.cmpi eq, %arg0, %c0_i32 : i32
    %1 = arith.extui %0 : i1 to i32
    %c0_i32_0 = arith.constant 0 : i32
    %2 = arith.cmpi ne, %1, %c0_i32_0 : i32
    scf.if %2 {
      %cst_14 = arith.constant 0.000000e+00 : f32
      %30 = vector.broadcast %cst_14 : f32 to vector<1x128xf32>
      %c0_15 = arith.constant 0 : index
      %c0_16 = arith.constant 0 : index
      %31 = vector.load %arg6[%c0_15, %c0_16] : memref<1x128xf32, #tpu.memory_space<vmem>>, vector<1x128xf32>
      tpu.vector_store %arg6[%c0_15, %c0_16], %30 {strides = array<i32>} : memref<1x128xf32, #tpu.memory_space<vmem>>, vector<1x128xf32>,
      %cst_17 = arith.constant 0.000000e+00 : f32
      %32 = vector.broadcast %cst_17 : f32 to vector<1x128xf32>
      %c0_18 = arith.constant 0 : index
      %c0_19 = arith.constant 0 : index
      %33 = vector.load %arg7[%c0_18, %c0_19] : memref<1x128xf32, #tpu.memory_space<vmem>>, vector<1x128xf32>
      tpu.vector_store %arg7[%c0_18, %c0_19], %32 {strides = array<i32>} : memref<1x128xf32, #tpu.memory_space<vmem>>, vector<1x128xf32>,
      %c0_20 = arith.constant 0 : index
      %c0_21 = arith.constant 0 : index
      %34 = vector.load %arg1[%c0_20, %c0_21] : memref<5x128xf32, #tpu.memory_space<vmem>>, vector<5x128xf32>
      %c0_22 = arith.constant 0 : index
      %c0_23 = arith.constant 0 : index
      %35 = vector.load %arg3[%c0_22, %c0_23] : memref<128x128xf32, #tpu.memory_space<vmem>>, vector<128x128xf32>
      %cst_24 = arith.constant dense<0.000000e+00> : vector<5x128xf32>
      %36 = tpu.matmul %34, %35, %cst_24 {dimension_numbers = #tpu.dot_dimension_numbers<[1], [0], [0], [1], [0, 0, 1, 1], [], []>} : vector<5x128xf32>, vector<128x128xf32>, vector<5x128xf32> -> vector<5x128xf32>
      %c0_25 = arith.constant 0 : index
      %c0_26 = arith.constant 0 : index
      %37 = vector.load %arg4[%c0_25, %c0_26] : memref<1x128xf32, #tpu.memory_space<vmem>>, vector<1x128xf32>
      %38 = vector.broadcast %37 : vector<1x128xf32> to vector<5x128xf32>
      %39 = arith.addf %36, %38 : vector<5x128xf32>
      %cst_27 = arith.constant dense<0.000000e+00> : vector<128xf32>
      %40 = vector.multi_reduction <add>, %39, %cst_27 [0] : vector<5x128xf32> to vector<128xf32>
      %41 = vector.shape_cast %40 : vector<128xf32> to vector<1x128xf32>
      %c0_28 = arith.constant 0 : index
      %c0_29 = arith.constant 0 : index
      %42 = vector.load %arg8[%c0_28, %c0_29] : memref<1x128xf32, #tpu.memory_space<vmem>>, vector<1x128xf32>
      tpu.vector_store %arg8[%c0_28, %c0_29], %41 {strides = array<i32>} : memref<1x128xf32, #tpu.memory_space<vmem>>, vector<1x128xf32>,
      %43 = arith.mulf %39, %39 : vector<5x128xf32>
      %cst_30 = arith.constant dense<0.000000e+00> : vector<128xf32>
      %44 = vector.multi_reduction <add>, %43, %cst_30 [0] : vector<5x128xf32> to vector<128xf32>
      %45 = vector.shape_cast %44 : vector<128xf32> to vector<1x128xf32>
      %c0_31 = arith.constant 0 : index
      %c0_32 = arith.constant 0 : index
      %46 = vector.load %arg9[%c0_31, %c0_32] : memref<1x128xf32, #tpu.memory_space<vmem>>, vector<1x128xf32>
      tpu.vector_store %arg9[%c0_31, %c0_32], %45 {strides = array<i32>} : memref<1x128xf32, #tpu.memory_space<vmem>>, vector<1x128xf32>,
    } else {
    }
    %c0 = arith.constant 0 : index
    %c0_1 = arith.constant 0 : index
    %3 = vector.load %arg2[%c0, %c0_1] : memref<24x128xf32, #tpu.memory_space<vmem>>, vector<24x128xf32>
    %4 = tpu.iota {dimensions = array<i32: 0>} : vector<24x128xi32>
    %c24_i32 = arith.constant 24 : i32
    %5 = arith.muli %arg0, %c24_i32 : i32
    %6 = vector.broadcast %5 : i32 to vector<24x128xi32>
    %7 = arith.addi %4, %6 : vector<24x128xi32>
    %c20_i32 = arith.constant 20 : i32
    %8 = vector.broadcast %c20_i32 : i32 to vector<24x128xi32>
    %9 = arith.cmpi slt, %7, %8 : vector<24x128xi32>
    %10 = tpu.iota {dimensions = array<i32: 1>} : vector<24x128xi32>
    %c32_i32 = arith.constant 32 : i32
    %11 = vector.broadcast %c32_i32 : i32 to vector<24x128xi32>
    %12 = arith.cmpi slt, %10, %11 : vector<24x128xi32>
    %13 = arith.andi %9, %12 : vector<24x128xi1>
    %cst = arith.constant 0.000000e+00 : f32
    %14 = vector.broadcast %cst : f32 to vector<24x128xf32>
    %15 = arith.select %13, %3, %14 : vector<24x128xi1>, vector<24x128xf32>
    %c0_2 = arith.constant 0 : index
    %c0_3 = arith.constant 0 : index
    %16 = vector.load %arg6[%c0_2, %c0_3] : memref<1x128xf32, #tpu.memory_space<vmem>>, vector<1x128xf32>
    %cst_4 = arith.constant dense<0.000000e+00> : vector<128xf32>
    %17 = vector.multi_reduction <add>, %15, %cst_4 [0] : vector<24x128xf32> to vector<128xf32>
    %18 = vector.shape_cast %17 : vector<128xf32> to vector<1x128xf32>
    %19 = arith.addf %16, %18 : vector<1x128xf32>
    %c0_5 = arith.constant 0 : index
    %c0_6 = arith.constant 0 : index
    %20 = vector.load %arg6[%c0_5, %c0_6] : memref<1x128xf32, #tpu.memory_space<vmem>>, vector<1x128xf32>
    tpu.vector_store %arg6[%c0_5, %c0_6], %19 {strides = array<i32>} : memref<1x128xf32, #tpu.memory_space<vmem>>, vector<1x128xf32>,
    %c0_7 = arith.constant 0 : index
    %c0_8 = arith.constant 0 : index
    %21 = vector.load %arg7[%c0_7, %c0_8] : memref<1x128xf32, #tpu.memory_space<vmem>>, vector<1x128xf32>
    %22 = arith.mulf %15, %15 : vector<24x128xf32>
    %cst_9 = arith.constant dense<0.000000e+00> : vector<128xf32>
    %23 = vector.multi_reduction <add>, %22, %cst_9 [0] : vector<24x128xf32> to vector<128xf32>
    %24 = vector.shape_cast %23 : vector<128xf32> to vector<1x128xf32>
    %25 = arith.addf %21, %24 : vector<1x128xf32>
    %c0_10 = arith.constant 0 : index
    %c0_11 = arith.constant 0 : index
    %26 = vector.load %arg7[%c0_10, %c0_11] : memref<1x128xf32, #tpu.memory_space<vmem>>, vector<1x128xf32>
    tpu.vector_store %arg7[%c0_10, %c0_11], %25 {strides = array<i32>} : memref<1x128xf32, #tpu.memory_space<vmem>>, vector<1x128xf32>,
    %c0_i32_12 = arith.constant 0 : i32
    %27 = arith.cmpi eq, %arg0, %c0_i32_12 : i32
    %28 = arith.extui %27 : i1 to i32
    %c0_i32_13 = arith.constant 0 : i32
    %29 = arith.cmpi ne, %28, %c0_i32_13 : i32
    scf.if %29 {
      %c0_14 = arith.constant 0 : index
      %c0_15 = arith.constant 0 : index
      %30 = vector.load %arg8[%c0_14, %c0_15] : memref<1x128xf32, #tpu.memory_space<vmem>>, vector<1x128xf32>
      %c0_16 = arith.constant 0 : index
      %c0_17 = arith.constant 0 : index
      %31 = vector.load %arg6[%c0_16, %c0_17] : memref<1x128xf32, #tpu.memory_space<vmem>>, vector<1x128xf32>
      %32 = arith.mulf %30, %31 : vector<1x128xf32>
      %c0_18 = arith.constant 0 : index
      %c0_19 = arith.constant 0 : index
      %33 = vector.load %arg9[%c0_18, %c0_19] : memref<1x128xf32, #tpu.memory_space<vmem>>, vector<1x128xf32>
      %cst_20 = arith.constant 2.000000e+01 : f32
      %34 = vector.broadcast %cst_20 : f32 to vector<1x128xf32>
      %35 = arith.mulf %34, %33 : vector<1x128xf32>
      %c0_21 = arith.constant 0 : index
      %c0_22 = arith.constant 0 : index
      %36 = vector.load %arg7[%c0_21, %c0_22] : memref<1x128xf32, #tpu.memory_space<vmem>>, vector<1x128xf32>
      %cst_23 = arith.constant 5.000000e+00 : f32
      %37 = vector.broadcast %cst_23 : f32 to vector<1x128xf32>
      %38 = arith.mulf %37, %36 : vector<1x128xf32>
      %39 = arith.mulf %35, %38 : vector<1x128xf32>
      %cst_24 = arith.constant 1.000000e-16 : f32
      %40 = vector.broadcast %cst_24 : f32 to vector<1x128xf32>
      %41 = arith.maximumf %39, %40 : vector<1x128xf32>
      %42 = math.rsqrt %41 : vector<1x128xf32>
      %43 = arith.mulf %32, %42 : vector<1x128xf32>
      %cst_25 = arith.constant dense<0.000000e+00> : vector<1xf32>
      %44 = vector.multi_reduction <add>, %43, %cst_25 [1] : vector<1x128xf32> to vector<1xf32>
      %45 = vector.shape_cast %44 : vector<1xf32> to vector<1x1xf32>
      %cst_26 = arith.constant 3.125000e-02 : f32
      %46 = vector.broadcast %cst_26 : f32 to vector<1x1xf32>
      %47 = arith.mulf %45, %46 : vector<1x1xf32>
      %c0_27 = arith.constant 0 : index
      %c0_28 = arith.constant 0 : index
      %48 = vector.load %arg5[%c0_27, %c0_28] : memref<1x1xf32, #tpu.memory_space<vmem>>, vector<1x1xf32>
      tpu.vector_store %arg5[%c0_27, %c0_28], %47 {strides = array<i32>} : memref<1x1xf32, #tpu.memory_space<vmem>>, vector<1x1xf32>,
    } else {
    }
    return
  }
  func.func @transform_0(%arg0: i32) -> (i32, i32) {
    %c0_i32 = arith.constant 0 : i32
    %c0_i32_0 = arith.constant 0 : i32
    %c0_i32_1 = arith.constant 0 : i32
    return %c0_i32, %c0_i32_0 : i32, i32
  }
  func.func @transform_1(%arg0: i32) -> (i32, i32) {
    %c0_i32 = arith.constant 0 : i32
    %c0_i32_0 = arith.constant 0 : i32
    return %arg0, %c0_i32 : i32, i32
  }
  func.func @transform_2(%arg0: i32) -> (i32, i32) {
    %c0_i32 = arith.constant 0 : i32
    %c0_i32_0 = arith.constant 0 : i32
    %c0_i32_1 = arith.constant 0 : i32
    return %c0_i32, %c0_i32_0 : i32, i32
  }
  func.func @transform_3(%arg0: i32) -> (i32, i32) {
    %c0_i32 = arith.constant 0 : i32
    %c0_i32_0 = arith.constant 0 : i32
    %c0_i32_1 = arith.constant 0 : i32
    return %c0_i32, %c0_i32_0 : i32, i32
  }
  func.func @transform_4(%arg0: i32) -> (i32, i32) {
    %c0_i32 = arith.constant 0 : i32
    %c0_i32_0 = arith.constant 0 : i32
    %c0_i32_1 = arith.constant 0 : i32
    return %c0_i32, %c0_i32_0 : i32, i32
  }
}

</mosaic_0001>

<llo_original>
// kernel: tpu_custom_call.1
$region0: #{tpu_custom_call.1}
  #allocation0 [shape = 'u32[]', space=smem, size = 0x4, offset = 0x4, fixed_abs, tag = 'smem constant byte address 0x4 - core index']
  #allocation1 [shape = 'u32[72,128]{1,0:T(1,128)}', space=vmem, size = 0x9000, scoped, tag = 'internal scratch']
  #allocation2 [shape = 'f32[1,128]{1,0:T(1,128)}', space=vmem, size = 0x200, scoped, tag = 'scratch operand']
  #allocation3 [shape = 'f32[1,128]{1,0:T(1,128)}', space=vmem, size = 0x200, scoped, tag = 'scratch operand']
  #allocation4 [shape = 'f32[1,128]{1,0:T(1,128)}', space=vmem, size = 0x200, scoped, tag = 'scratch operand']
  #allocation5 [shape = 'f32[1,128]{1,0:T(1,128)}', space=vmem, size = 0x200, scoped, tag = 'scratch operand']
  %s0 = inlined_call_operand.hbm [shape: f32[5,128], index: 0, kind: input, shape index: {}]
  %s1 = inlined_call_operand.hbm [shape: f32[20,32], index: 1, kind: input, shape index: {}]
  %s2 = inlined_call_operand.hbm [shape: f32[128,128], index: 2, kind: input, shape index: {}]
  %s3 = inlined_call_operand.vmem [shape: f32[1,128], index: 3, kind: input, shape index: {}]
  %s4 = inlined_call_operand.hbm [shape: f32[1,1], index: 4, kind: output, shape index: {}]
  %s5 = sld [smem:[#allocation0]]
  $region46: #{tpu_custom_call.1} parent=0
    _
  %s7 = ssub.s32 1, %s5
  %s8 = scalar_select 0, %s7, %s5
  $region1: #{tpu_custom_call.1} parent=0
    #allocation6 [shape = 'u8[4096]{0}', space=vmem, size = 0x1000, scoped, tag = 'input window, operand 0, single buffered']
    #allocation7 [shape = 's32[1]{0}', space=sflag, size = 0x4, scoped, tag = 'scoped memory for tpu_custom_call.1']
    #allocation8 [shape = 's32[1]{0}', space=sflag, size = 0x4, scoped, tag = 'scoped memory for tpu_custom_call.1']
    #allocation9 [shape = 'u8[12288]{0}', space=vmem, size = 0x3000, scoped, tag = 'input window, operand 1, single buffered']
    #allocation10 [shape = 's32[1]{0}', space=sflag, size = 0x4, scoped, tag = 'scoped memory for tpu_custom_call.1']
    #allocation11 [shape = 'u8[65536]{0}', space=vmem, size = 0x10000, scoped, tag = 'input window, operand 2, single buffered']
    #allocation12 [shape = 'u8[512]{0}', space=vmem, size = 0x400, scoped, tag = 'output window, operand 0, single buffered']
    %9 = vsyncpa [#allocation7], 0
    %10 = vsyncpa [#allocation10], 0
    %11 = vsyncpa [#allocation8], 0
    // Predicated region
    $region2: #{tpu_custom_call.1} parent=1 // pred_check
      _
    $region3: #{tpu_custom_call.1} parent=1 // pred_check_branch
      %13 = sbr.rel (0) target = $region5
    $region4: #{tpu_custom_call.1} parent=1 // pred_region
      %15 = vsyncadd [#allocation7], 0
      %s17 = sshll.u32 %s0, 4
      %s18 = int_to_ptr.hbm [resolvable:$true] %s17
      %s19 = sshll.u32 [#allocation6], 4
      %s20 = int_to_ptr.vmem [resolvable:$true] %s19
      %22 = dma.hbm_to_vmem [thread:$0]  %s18, 128, %s20, [#allocation7]
    $region5: #{tpu_custom_call.1} parent=1 // pred_fallthru
      _
    // Predicated region
    $region6: #{tpu_custom_call.1} parent=1 // pred_check
      _
    $region7: #{tpu_custom_call.1} parent=1 // pred_check_branch
      %24 = sbr.rel (0) target = $region9
    $region8: #{tpu_custom_call.1} parent=1 // pred_region
      %26 = vsyncadd [#allocation10], 0
      %s27 = sshll.u32 %s1, 4
      %s28 = int_to_ptr.hbm [resolvable:$true] %s27
      %s29 = sshll.u32 [#allocation9], 4
      %s30 = int_to_ptr.vmem [resolvable:$true] %s29
      %35 = dma.hbm_to_vmem [thread:$0]  %s28, 384, %s30, [#allocation10], 128, 128, 8
    $region9: #{tpu_custom_call.1} parent=1 // pred_fallthru
      _
    // Predicated region
    $region10: #{tpu_custom_call.1} parent=1 // pred_check
      _
    $region11: #{tpu_custom_call.1} parent=1 // pred_check_branch
      %37 = sbr.rel (0) target = $region13
    $region12: #{tpu_custom_call.1} parent=1 // pred_region
      %39 = vsyncadd [#allocation10], 0
      %s40 = sshll.u32 %s2, 4
      %s41 = int_to_ptr.hbm [resolvable:$true] %s40
      %s42 = sshll.u32 [#allocation11], 4
      %s43 = int_to_ptr.vmem [resolvable:$true] %s42
      %48 = dma.hbm_to_vmem [thread:$0]  %s41, 2048, %s43, [#allocation10], 128, 128, 8
    $region13: #{tpu_custom_call.1} parent=1 // pred_fallthru
      _
    // Predicated region
    $region14: #{tpu_custom_call.1} parent=1 // pred_check
      _
    $region15: #{tpu_custom_call.1} parent=1 // pred_check_branch
      %50 = sbr.rel (0) target = $region17
    $region16: #{tpu_custom_call.1} parent=1 // pred_region
      _
    $region17: #{tpu_custom_call.1} parent=1 // pred_fallthru
      _
    // Predicated region
    $region18: #{tpu_custom_call.1} parent=1 // pred_check
      _
    $region19: #{tpu_custom_call.1} parent=1 // pred_check_branch
      %52 = sbr.rel (0) target = $region21
    $region20: #{tpu_custom_call.1} parent=1 // pred_region
      %54 = dma.done [#allocation7], 128
    $region21: #{tpu_custom_call.1} parent=1 // pred_fallthru
      _
    // Predicated region
    $region22: #{tpu_custom_call.1} parent=1 // pred_check
      _
    $region23: #{tpu_custom_call.1} parent=1 // pred_check_branch
      %56 = sbr.rel (0) target = $region25
    $region24: #{tpu_custom_call.1} parent=1 // pred_region
      %58 = dma.done [#allocation10], 384
    $region25: #{tpu_custom_call.1} parent=1 // pred_fallthru
      _
    // Predicated region
    $region26: #{tpu_custom_call.1} parent=1 // pred_check
      _
    $region27: #{tpu_custom_call.1} parent=1 // pred_check_branch
      %60 = sbr.rel (0) target = $region29
    $region28: #{tpu_custom_call.1} parent=1 // pred_region
      %62 = dma.done [#allocation10], 2048
    $region29: #{tpu_custom_call.1} parent=1 // pred_fallthru
      _
    %p63 = scmp.eq.s32.totalorder 0, 0
    // Predicated region
    $region30: #{tpu_custom_call.1} parent=1 // pred_check
      %p64 = pneg %p63
    $region31: #{tpu_custom_call.1} parent=1 // pred_check_branch
      %66 = sbr.rel (%p64) target = $region33
    $region32: #{tpu_custom_call.1} parent=1 // pred_region
      %67 = vst [vmem:[#allocation2] sm:$0x1] 0.0
      %68 = vst [vmem:[#allocation3] sm:$0x1] 0.0
      %v69 = vld [vmem:[#allocation6] sm:$0x1f]
      %v70 = vld [vmem:[#allocation11] sm:$0xff]
      %v71 = vld [vmem:[#allocation11 + $0x8] sm:$0xff]
      %v72 = vld [vmem:[#allocation11 + $0x10] sm:$0xff]
      %v73 = vld [vmem:[#allocation11 + $0x18] sm:$0xff]
      %v74 = vld [vmem:[#allocation11 + $0x20] sm:$0xff]
      %v75 = vld [vmem:[#allocation11 + $0x28] sm:$0xff]
      %v76 = vld [vmem:[#allocation11 + $0x30] sm:$0xff]
      %v77 = vld [vmem:[#allocation11 + $0x38] sm:$0xff]
      %v78 = vld [vmem:[#allocation11 + $0x40] sm:$0xff]
      %v79 = vld [vmem:[#allocation11 + $0x48] sm:$0xff]
      %v80 = vld [vmem:[#allocation11 + $0x50] sm:$0xff]
      %v81 = vld [vmem:[#allocation11 + $0x58] sm:$0xff]
      %v82 = vld [vmem:[#allocation11 + $0x60] sm:$0xff]
      %v83 = vld [vmem:[#allocation11 + $0x68] sm:$0xff]
      %v84 = vld [vmem:[#allocation11 + $0x70] sm:$0xff]
      %v85 = vld [vmem:[#allocation11 + $0x78] sm:$0xff]
      %v86 = vld [vmem:[%s3] sm:$0x1]
      %v88 = vperm.slane %v86, 0
      %90 = vmatpush.msra.mxu0 %v85
      %91 = vmatpush.msra.mxu0 %v84
      %92 = vmatpush.msra.mxu0 %v83
      %93 = vmatpush.msra.mxu0 %v82
      %94 = vmatpush.msra.mxu0 %v81
      %95 = vmatpush.msra.mxu0 %v80
      %96 = vmatpush.msra.mxu0 %v79
      %97 = vmatpush.msra.mxu0 %v78
      %98 = vmatpush.msra.mxu0 %v77
      %99 = vmatpush.msra.mxu0 %v76
      %100 = vmatpush.msra.mxu0 %v75
      %101 = vmatpush.msra.mxu0 %v74
      %102 = vmatpush.msra.mxu0 %v73
      %103 = vmatpush.msra.mxu0 %v72
      %104 = vmatpush.msra.mxu0 %v71
      %105 = vmatpush.msra.mxu0 %v70
      %106 = vmatmul.f32.gmra.mxu0 %v69
      %v107 = vpop.f32.mrf.mxu0
      %v108 = vadd.f32 %v88, %v107
      %109 = vdwg.mxu0
      %vm110 = vcmask 1044480
      %v111 = vsel %vm110, %v108, 0.0
      %v112 = vrot.slane %v111, 4
      %v113 = vadd.f32 %v111, %v112
      %v114 = vrot.slane %v113, 2
      %v115 = vadd.f32 %v113, %v114
      %v116 = vrot.slane %v115, 1
      %v117 = vadd.f32 %v115, %v116
      %118 = vst [vmem:[#allocation4] sm:$0x1] %v117
      %v119 = vmul.f32 %v108, %v108
      %v120 = vsel %vm110, %v119, 0.0
      %v121 = vrot.slane %v120, 4
      %v122 = vadd.f32 %v120, %v121
      %v123 = vrot.slane %v122, 2
      %v124 = vadd.f32 %v122, %v123
      %v125 = vrot.slane %v124, 1
      %v126 = vadd.f32 %v124, %v125
      %127 = vst [vmem:[#allocation5] sm:$0x1] %v126
    $region33: #{tpu_custom_call.1} parent=1 // pred_fallthru
      _
    %v128 = vld [vmem:[#allocation9] sm:$0xff]
    %v129 = vld [vmem:[#allocation9 + $0x8] sm:$0xff]
    %v130 = vld [vmem:[#allocation9 + $0x10] sm:$0xff]
    %v131 = vlaneseq
    %v132 = vshrl.u32 %v131, 7
    %v133 = vadd.s32 %v132, 8
    %v134 = vadd.s32 %v132, 16
    %s135 = smul.u32 0, 24
    %v136 = vstv %s135
    %v137 = vadd.s32 %v132, %v136
    %v138 = vadd.s32 %v133, %v136
    %v139 = vadd.s32 %v134, %v136
    %vm140 = vcmp.lt.s32.totalorder %v137, 20
    %vm141 = vcmp.lt.s32.totalorder %v138, 20
    %vm142 = vcmp.lt.s32.totalorder %v139, 20
    %v143 = vlaneseq
    %v144 = vand.u32 %v143, 127
    %vm145 = vcmp.lt.s32.totalorder %v144, 32
    %vm146 = vmand %vm140, %vm145
    %vm147 = vmand %vm141, %vm145
    %vm148 = vmand %vm142, %vm145
    %v149 = vsel %vm146, %v128, 0.0
    %v150 = vsel %vm147, %v129, 0.0
    %v151 = vsel %vm148, %v130, 0.0
    %v152 = vld [vmem:[#allocation2] sm:$0x1]
    %v153 = vadd.f32 %v149, %v150
    %v154 = vadd.f32 %v153, %v151
    %v155 = vrot.slane %v154, 4
    %v156 = vadd.f32 %v154, %v155
    %v157 = vrot.slane %v156, 2
    %v158 = vadd.f32 %v156, %v157
    %v159 = vrot.slane %v158, 1
    %v160 = vadd.f32 %v158, %v159
    %v161 = vadd.f32 %v152, %v160
    %162 = vst [vmem:[#allocation2] sm:$0x1] %v161
    %v163 = vld [vmem:[#allocation3] sm:$0x1]
    %v164 = vmul.f32 %v149, %v149
    %v165 = vmul.f32 %v150, %v150
    %v166 = vmul.f32 %v151, %v151
    %v167 = vadd.f32 %v164, %v165
    %v168 = vadd.f32 %v167, %v166
    %v169 = vrot.slane %v168, 4
    %v170 = vadd.f32 %v168, %v169
    %v171 = vrot.slane %v170, 2
    %v172 = vadd.f32 %v170, %v171
    %v173 = vrot.slane %v172, 1
    %v174 = vadd.f32 %v172, %v173
    %v175 = vadd.f32 %v163, %v174
    %176 = vst [vmem:[#allocation3] sm:$0x1] %v175
    // Predicated region
    $region34: #{tpu_custom_call.1} parent=1 // pred_check
      %p177 = pneg %p63
    $region35: #{tpu_custom_call.1} parent=1 // pred_check_branch
      %179 = sbr.rel (%p177) target = $region37
    $region36: #{tpu_custom_call.1} parent=1 // pred_region
      %v180 = vld [vmem:[#allocation4] sm:$0x1]
      %v181 = vld [vmem:[#allocation2] sm:$0x1]
      %v182 = vmul.f32 %v180, %v181
      %v183 = vld [vmem:[#allocation5] sm:$0x1]
      %v184 = vmul.f32 %v183, 20.0
      %v185 = vld [vmem:[#allocation3] sm:$0x1]
      %v186 = vmul.f32 %v185, 5.0
      %v187 = vmul.f32 %v184, %v186
      %v188 = vmax.f32 %v187, 1e-16
      %v189 = vrsqrt.pop %v188
      %v190 = vmul.f32 %v189, %v188
      %v191 = vmul.f32 %v190, %v189
      %v192 = vmul.f32 0.5, %v191
      %v193 = vsub.f32 1.5, %v192
      %v194 = vmul.f32 %v189, %v193
      %vm195 = vweird.f32 %v188
      %vm196 = vweird.f32 %v189
      %vm197 = vmor %vm195, %vm196
      %v198 = vsel %vm197, %v189, %v194
      %v199 = vmul.f32 %v182, %v198
      %vm200 = vcmask 1040384
      %v201 = vsel %vm200, %v199, 0.0
      %202 = vadd.xlane.f32.xlu0 %v201
      %v203 = vpop.xlane.xlu0 %202
      %v204 = vmul.f32 %v203, 0.03125
      %vm205 = vcmask 0
      %206 = vst.msk [vmem:[#allocation12] sm:$0x1] %vm205, %v204
    $region37: #{tpu_custom_call.1} parent=1 // pred_fallthru
      _
    // Predicated region
    $region38: #{tpu_custom_call.1} parent=1 // pred_check
      _
    $region39: #{tpu_custom_call.1} parent=1 // pred_check_branch
      %208 = sbr.rel (0) target = $region41
    $region40: #{tpu_custom_call.1} parent=1 // pred_region
      %210 = vsyncadd [#allocation8], 0
      %s212 = sshll.u32 [#allocation12], 4
      %s213 = int_to_ptr.vmem [resolvable:$true] %s212
      %s214 = sshll.u32 %s4, 4
      %s215 = int_to_ptr.hbm [resolvable:$true] %s214
      %217 = dma.vmem_to_hbm [thread:$0]  %s213, 16, %s215, [#allocation8]
    $region41: #{tpu_custom_call.1} parent=1 // pred_fallthru
      _
    // Predicated region
    $region42: #{tpu_custom_call.1} parent=1 // pred_check
      _
    $region43: #{tpu_custom_call.1} parent=1 // pred_check_branch
      %219 = sbr.rel (0) target = $region45
    $region44: #{tpu_custom_call.1} parent=1 // pred_region
      %221 = dma.done [#allocation8], 16
    $region45: #{tpu_custom_call.1} parent=1 // pred_fallthru
      _
    %222 = vsyncpa [#allocation7], 1
    %223 = vsyncpa [#allocation10], 1
    %224 = vsyncpa [#allocation8], 1

</llo_original>
